<compile_context>
chip_gen: v6e
topology: v6e:2x2x1
jax: 0.10.0
libtpu: 0.0.40
codegen_flags: <defaults>
</compile_context>

<pallas_src>
import jax
import jax.numpy as jnp
from jax.experimental import pallas as pl
from jax.experimental.pallas import tpu as pltpu


def _round_up(x, m):
    return (x + m - 1) // m * m


def _vmem_limit(buffer_bytes, *, headroom=2 << 20, lo=32 << 20, hi=64 << 20):
    """Scoped-VMEM request sized from the double-buffered tile footprint."""
    return int(min(max(buffer_bytes + headroom, lo), hi))


# ---------------------------------------------------------------------------
# Pass 1: conv matmul on the MXU; store bf16 activation + per-tile partial
#         per-channel sum / sum-of-squares (one row of the partials per tile).
# ---------------------------------------------------------------------------
def _conv_stats_kernel(p_ref, w_ref, y_ref, sum_ref, sumsq_ref):
    # bf16 x bf16 -> f32 accumulation on the MXU.
    y = jnp.dot(p_ref[...], w_ref[...], preferred_element_type=jnp.float32)
    y_ref[...] = y.astype(y_ref.dtype)
    # Padded zero rows contribute 0 to both statistics, so dividing by the
    # true element count M in the wrapper gives the exact mean/variance.
    sum_ref[...] = jnp.sum(y, axis=0, keepdims=True)[None]
    sumsq_ref[...] = jnp.sum(y * y, axis=0, keepdims=True)[None]


# ---------------------------------------------------------------------------
# Pass 2: pure element-wise BatchNorm apply: out = y * scale + shift.
# ---------------------------------------------------------------------------
def _bn_apply_kernel(y_ref, scale_ref, shift_ref, o_ref):
    y = y_ref[...].astype(jnp.float32)
    o_ref[...] = (y * scale_ref[...] + shift_ref[...]).astype(o_ref.dtype)


# ---------------------------------------------------------------------------
# Wrapper: NCHW <-> NHWC glue, padding, im2col, two pallas_calls.
# ---------------------------------------------------------------------------
def basic_conv2d(x_nchw, weight_oihw, gamma, beta, *, stride=1, padding=0,
                 dilation=1, eps=1e-5, tile_m=512,
                 compute_dtype=jnp.bfloat16, out_dtype=jnp.float32):
    """Forward of BasicConv2d. x_nchw: [N, Cin, H, W] float32."""
    N, Cin, H, W = x_nchw.shape
    Cout, _, KH, KW = weight_oihw.shape

    H_out = (H + 2 * padding - dilation * (KH - 1) - 1) // stride + 1
    W_out = (W + 2 * padding - dilation * (KW - 1) - 1) // stride + 1
    M = N * H_out * W_out
    K = KH * KW * Cin

    # Hardware-aligned padded sizes: lane-dense loads/stores, full MXU columns.
    K_pad = _round_up(K, 128)
    C_pad = _round_up(Cout, 128)
    M_pad = _round_up(M, tile_m)
    num_tiles = M_pad // tile_m

    cd_size = jnp.dtype(compute_dtype).itemsize
    out_size = jnp.dtype(out_dtype).itemsize

    # ---- glue: NCHW -> NHWC, spatial pad, im2col -----------------------------
    x = jnp.transpose(x_nchw, (0, 2, 3, 1))                      # [N, H, W, Cin]
    xp = jnp.pad(x, ((0, 0), (padding, padding), (padding, padding), (0, 0)))
    cols = []
    for dh in range(KH):
        for dw in range(KW):
            hs, ws = dh * dilation, dw * dilation
            cols.append(xp[:, hs: hs + (H_out - 1) * stride + 1: stride,
                           ws: ws + (W_out - 1) * stride + 1: stride, :])
    patches = jnp.concatenate(cols, axis=-1).reshape(M, K)       # (dh, dw, c)
    patches = jnp.pad(patches, ((0, M_pad - M), (0, K_pad - K)))
    patches = patches.astype(compute_dtype)

    # PyTorch weight [Cout, Cin, KH, KW] -> [KH, KW, Cin, Cout] -> [K, Cout]
    w_mat = jnp.transpose(weight_oihw, (2, 3, 1, 0)).reshape(K, Cout)
    w_mat = jnp.pad(w_mat, ((0, K_pad - K), (0, C_pad - Cout)))
    w_mat = w_mat.astype(compute_dtype)

    # ---- pass 1: conv matmul + per-tile partial stats (megacore-parallel) ----
    p1_bytes = (2 * tile_m * K_pad * cd_size        # patches, double-buffered
                + 2 * K_pad * C_pad * cd_size       # weights (budget 2x anyway)
                + 2 * tile_m * C_pad * cd_size      # y output, double-buffered
                + 4 * 2 * C_pad * 4)                # partial sum / sumsq blocks
    y_flat, psum, psumsq = pl.pallas_call(
        _conv_stats_kernel,
        out_shape=(jax.ShapeDtypeStruct((M_pad, C_pad), compute_dtype),
                   jax.ShapeDtypeStruct((num_tiles, 1, C_pad), jnp.float32),
                   jax.ShapeDtypeStruct((num_tiles, 1, C_pad), jnp.float32)),
        grid_spec=pltpu.PrefetchScalarGridSpec(
            num_scalar_prefetch=0,
            grid=(num_tiles,),
            in_specs=[pl.BlockSpec((tile_m, K_pad), lambda i: (i, 0)),
                      # constant index_map -> never re-fetched: single buffer.
                      pl.BlockSpec((K_pad, C_pad), lambda i: (0, 0),
                                   pipeline_mode=pl.Buffered(1))],
            out_specs=[pl.BlockSpec((tile_m, C_pad), lambda i: (i, 0)),
                       pl.BlockSpec((1, 1, C_pad), lambda i: (i, 0, 0)),
                       pl.BlockSpec((1, 1, C_pad), lambda i: (i, 0, 0))]),
        compiler_params=pltpu.CompilerParams(
            dimension_semantics=("parallel",),
            vmem_limit_bytes=_vmem_limit(p1_bytes)),
    )(patches, w_mat)

    # ---- fold BN epilogue once on tiny [*, C_pad] tensors (plain XLA) --------
    sum_y = jnp.sum(psum, axis=0)                                 # [1, C_pad]
    sum_y2 = jnp.sum(psumsq, axis=0)                              # [1, C_pad]
    inv_m = 1.0 / float(M)
    mean = sum_y * inv_m
    var = jnp.maximum(sum_y2 * inv_m - mean * mean, 0.0)          # biased var
    gamma_p = jnp.pad(gamma.astype(jnp.float32), (0, C_pad - Cout)).reshape(1, C_pad)
    beta_p = jnp.pad(beta.astype(jnp.float32), (0, C_pad - Cout)).reshape(1, C_pad)
    scale = gamma_p * jax.lax.rsqrt(var + eps)
    shift = beta_p - mean * scale

    # ---- pass 2: pure element-wise normalize+affine (no matmul recompute) ----
    p2_bytes = (2 * tile_m * C_pad * cd_size        # y input, double-buffered
                + 2 * tile_m * C_pad * out_size     # output, double-buffered
                + 4 * C_pad * 4)                    # scale / shift
    out_flat = pl.pallas_call(
        _bn_apply_kernel,
        out_shape=jax.ShapeDtypeStruct((M_pad, C_pad), out_dtype),
        grid_spec=pltpu.PrefetchScalarGridSpec(
            num_scalar_prefetch=0,
            grid=(num_tiles,),
            in_specs=[pl.BlockSpec((tile_m, C_pad), lambda i: (i, 0)),
                      pl.BlockSpec((1, C_pad), lambda i: (0, 0)),
                      pl.BlockSpec((1, C_pad), lambda i: (0, 0))],
            out_specs=pl.BlockSpec((tile_m, C_pad), lambda i: (i, 0))),
        compiler_params=pltpu.CompilerParams(
            dimension_semantics=("parallel",),
            vmem_limit_bytes=_vmem_limit(p2_bytes)),
    )(y_flat, scale, shift)

    # ---- glue: strip padding, back to NCHW -----------------------------------
    out = out_flat[:M, :Cout].reshape(N, H_out, W_out, Cout)
    return jnp.transpose(out, (0, 3, 1, 2))                      # [N, Cout, Ho, Wo]


# ---------------------------------------------------------------------------
# Pure-JAX reference (f32 conv, training-mode BatchNorm, no ReLU).
# ---------------------------------------------------------------------------
def _reference(x, w, gamma, beta, *, stride=1, padding=0, dilation=1, eps=1e-5):
    y = jax.lax.conv_general_dilated(
        x, w, window_strides=(stride, stride),
        padding=[(padding, padding), (padding, padding)],
        rhs_dilation=(dilation, dilation),
        dimension_numbers=("NCHW", "OIHW", "NCHW"))
    mean = jnp.mean(y, axis=(0, 2, 3), keepdims=True)
    var = jnp.mean((y - mean) ** 2, axis=(0, 2, 3), keepdims=True)
    y = (y - mean) * jax.lax.rsqrt(var + eps)
    return y * gamma[None, :, None, None] + beta[None, :, None, None]


if __name__ == "__main__":
    # BasicConv2d(in_planes=4, out_planes=8, kernel_size=3, padding=1)
    N, Cin, Cout, H, W, KH, KW = 2, 4, 8, 16, 16, 3, 3

    key = jax.random.PRNGKey(0)
    kx, kw, kg, kb = jax.random.split(key, 4)
    x = jax.random.normal(kx, (N, Cin, H, W), dtype=jnp.float32)
    weight = jax.random.normal(kw, (Cout, Cin, KH, KW), dtype=jnp.float32) * 0.1
    gamma = 1.0 + 0.1 * jax.random.normal(kg, (Cout,), dtype=jnp.float32)
    beta = 0.1 * jax.random.normal(kb, (Cout,), dtype=jnp.float32)

    # tile_m=128 so the grid has several steps (M=512 -> 4 tiles) and the
    # per-tile partial-stat / pipeline structure is actually exercised.
    out = basic_conv2d(x, weight, gamma, beta, padding=1, tile_m=128)
    out = jax.block_until_ready(out)

    ref = _reference(x, weight, gamma, beta, padding=1)
    assert out.shape == ref.shape == (N, Cout, H, W)
    # bf16 MXU operands + bf16 activation round-trip (f32 accumulation and
    # f32 BN math) -> bf16-level tolerance on ~unit-variance outputs.
    max_err = float(jnp.max(jnp.abs(out - ref)))
    assert max_err < 5e-2, max_err

    print("KERNEL_OK")
</pallas_src>

<mosaic_0001>
module attributes {stable_mosaic.version = 11 : i64} {
  func.func @_conv_stats_kernel(%arg0: i32, %arg1: memref<128x128xbf16, #tpu.memory_space<vmem>>, %arg2: memref<128x128xbf16, #tpu.memory_space<vmem>>, %arg3: memref<128x128xbf16, #tpu.memory_space<vmem>>, %arg4: memref<1x1x128xf32, #tpu.memory_space<vmem>>, %arg5: memref<1x1x128xf32, #tpu.memory_space<vmem>>) attributes {dimension_semantics = [#tpu.dimension_semantics<parallel>], iteration_bounds = array<i64: 4>, scalar_prefetch = 0 : i64, scratch_operands = 0 : i64, tpu.core_type = #tpu.core_type<tc>, window_params = [{transform_indices = @transform_0, window_bounds = array<i64: 128, 128>}, {pipeline_mode = #tpu.pipeline_mode<synchronous>, transform_indices = @transform_1, window_bounds = array<i64: 128, 128>}, {transform_indices = @transform_2, window_bounds = array<i64: 128, 128>}, {transform_indices = @transform_3, window_bounds = array<i64: 1, 1, 128>}, {transform_indices = @transform_4, window_bounds = array<i64: 1, 1, 128>}]} {
    %c0 = arith.constant 0 : index
    %c0_0 = arith.constant 0 : index
    %0 = vector.load %arg1[%c0, %c0_0] : memref<128x128xbf16, #tpu.memory_space<vmem>>, vector<128x128xbf16>
    %c0_1 = arith.constant 0 : index
    %c0_2 = arith.constant 0 : index
    %1 = vector.load %arg2[%c0_1, %c0_2] : memref<128x128xbf16, #tpu.memory_space<vmem>>, vector<128x128xbf16>
    %cst = arith.constant dense<0.000000e+00> : vector<128x128xf32>
    %2 = tpu.matmul %0, %1, %cst {dimension_numbers = #tpu.dot_dimension_numbers<[1], [0], [0], [1], [0, 0, 1, 1], [], []>} : vector<128x128xbf16>, vector<128x128xbf16>, vector<128x128xf32> -> vector<128x128xf32>
    %3 = arith.truncf %2 : vector<128x128xf32> to vector<128x128xbf16>
    %c0_3 = arith.constant 0 : index
    %c0_4 = arith.constant 0 : index
    %4 = vector.load %arg3[%c0_3, %c0_4] : memref<128x128xbf16, #tpu.memory_space<vmem>>, vector<128x128xbf16>
    tpu.vector_store %arg3[%c0_3, %c0_4], %3 {strides = array<i32>} : memref<128x128xbf16, #tpu.memory_space<vmem>>, vector<128x128xbf16>,
    %cst_5 = arith.constant dense<0.000000e+00> : vector<128xf32>
    %5 = vector.multi_reduction <add>, %2, %cst_5 [0] : vector<128x128xf32> to vector<128xf32>
    %6 = vector.shape_cast %5 : vector<128xf32> to vector<1x128xf32>
    %7 = vector.shape_cast %6 : vector<1x128xf32> to vector<1x1x128xf32>
    %c0_6 = arith.constant 0 : index
    %c0_7 = arith.constant 0 : index
    %c0_8 = arith.constant 0 : index
    %8 = vector.load %arg4[%c0_6, %c0_7, %c0_8] : memref<1x1x128xf32, #tpu.memory_space<vmem>>, vector<1x1x128xf32>
    tpu.vector_store %arg4[%c0_6, %c0_7, %c0_8], %7 {strides = array<i32>} : memref<1x1x128xf32, #tpu.memory_space<vmem>>, vector<1x1x128xf32>,
    %9 = arith.mulf %2, %2 : vector<128x128xf32>
    %cst_9 = arith.constant dense<0.000000e+00> : vector<128xf32>
    %10 = vector.multi_reduction <add>, %9, %cst_9 [0] : vector<128x128xf32> to vector<128xf32>
    %11 = vector.shape_cast %10 : vector<128xf32> to vector<1x128xf32>
    %12 = vector.shape_cast %11 : vector<1x128xf32> to vector<1x1x128xf32>
    %c0_10 = arith.constant 0 : index
    %c0_11 = arith.constant 0 : index
    %c0_12 = arith.constant 0 : index
    %13 = vector.load %arg5[%c0_10, %c0_11, %c0_12] : memref<1x1x128xf32, #tpu.memory_space<vmem>>, vector<1x1x128xf32>
    tpu.vector_store %arg5[%c0_10, %c0_11, %c0_12], %12 {strides = array<i32>} : memref<1x1x128xf32, #tpu.memory_space<vmem>>, vector<1x1x128xf32>,
    return
  }
  func.func @transform_0(%arg0: i32) -> (i32, i32) {
    %c0_i32 = arith.constant 0 : i32
    %c0_i32_0 = arith.constant 0 : i32
    return %arg0, %c0_i32 : i32, i32
  }
  func.func @transform_1(%arg0: i32) -> (i32, i32) {
    %c0_i32 = arith.constant 0 : i32
    %c0_i32_0 = arith.constant 0 : i32
    %c0_i32_1 = arith.constant 0 : i32
    return %c0_i32, %c0_i32_0 : i32, i32
  }
  func.func @transform_2(%arg0: i32) -> (i32, i32) {
    %c0_i32 = arith.constant 0 : i32
    %c0_i32_0 = arith.constant 0 : i32
    return %arg0, %c0_i32 : i32, i32
  }
  func.func @transform_3(%arg0: i32) -> (i32, i32, i32) {
    %c0_i32 = arith.constant 0 : i32
    %c0_i32_0 = arith.constant 0 : i32
    %c0_i32_1 = arith.constant 0 : i32
    return %arg0, %c0_i32, %c0_i32_0 : i32, i32, i32
  }
  func.func @transform_4(%arg0: i32) -> (i32, i32, i32) {
    %c0_i32 = arith.constant 0 : i32
    %c0_i32_0 = arith.constant 0 : i32
    %c0_i32_1 = arith.constant 0 : i32
    return %arg0, %c0_i32, %c0_i32_0 : i32, i32, i32
  }
}

</mosaic_0001>

<llo_original>
// kernel: tpu_custom_call.1
$region0: #{tpu_custom_call.1}
  #allocation0 [shape = 'u32[]', space=smem, size = 0x4, offset = 0x4, fixed_abs, tag = 'smem constant byte address 0x4 - core index']
  #allocation1 [shape = 'u32[144,128]{1,0:T(1,128)}', space=vmem, size = 0x12000, scoped, tag = 'internal scratch']
  %s0 = inlined_call_operand.hbm [shape: bf16[512,128], index: 0, kind: input, shape index: {}]
  %s1 = inlined_call_operand.hbm [shape: bf16[128,128], index: 1, kind: input, shape index: {}]
  %s2 = inlined_call_operand.hbm [shape: bf16[512,128], index: 2, kind: output, shape index: {0}]
  %s3 = inlined_call_operand.hbm [shape: f32[4,1,128], index: 3, kind: output, shape index: {1}]
  %s4 = inlined_call_operand.hbm [shape: f32[4,1,128], index: 4, kind: output, shape index: {2}]
  %5 = xla_tuple %s2, %s3, %s4
  %s6 = sld [smem:[#allocation0]]
  $region65: #{tpu_custom_call.1} parent=0
    _
  %s8 = ssub.s32 1, %s6
  %s9 = scalar_select 0, %s8, %s6
  $region1: #{tpu_custom_call.1} parent=0
    #allocation2 [shape = 'u8[65536]{0}', space=vmem, size = 0x10000, scoped, tag = 'input window, operand 0']
    #allocation3 [shape = 's32[2]{0}', space=sflag, size = 0x8, scoped, tag = 'scoped memory for tpu_custom_call.1']
    #allocation4 [shape = 's32[2]{0}', space=sflag, size = 0x8, scoped, tag = 'scoped memory for tpu_custom_call.1']
    #allocation5 [shape = 'u8[32768]{0}', space=vmem, size = 0x8000, scoped, tag = 'input window, operand 1, single buffered']
    #allocation6 [shape = 's32[1]{0}', space=sflag, size = 0x4, scoped, tag = 'scoped memory for tpu_custom_call.1']
    #allocation7 [shape = 'u8[65536]{0}', space=vmem, size = 0x10000, scoped, tag = 'output window, operand 0']
    #allocation8 [shape = 'u8[1024]{0}', space=vmem, size = 0x400, scoped, tag = 'output window, operand 1']
    #allocation9 [shape = 's32[2]{0}', space=sflag, size = 0x8, scoped, tag = 'scoped memory for tpu_custom_call.1']
    #allocation10 [shape = 'u8[1024]{0}', space=vmem, size = 0x400, scoped, tag = 'output window, operand 2']
    %10 = vsyncpa [#allocation3], 0
    %s11 = scalar_lea.sflag [#allocation3], 1
    %12 = vsyncpa %s11, 0
    %13 = vsyncpa [#allocation6], 0
    %14 = vsyncpa [#allocation4], 0
    %s15 = scalar_lea.sflag [#allocation4], 1
    %16 = vsyncpa %s15, 0
    %17 = vsyncpa [#allocation9], 0
    %s18 = scalar_lea.sflag [#allocation9], 1
    %19 = vsyncpa %s18, 0
    loop: start=0, step=1, limit=6
    $region2: #{tpu_custom_call.1} parent=1 // loop_pre_header
      _
    $region3: #{tpu_custom_call.1} parent=1 // loop_header
      %s21 = sphi 0, %s25
      %p22 = scmp.ge.s32.totalorder %s21, 6
      %s31 = sphi 0, %s33
      %s34 = sphi 0, %s31
      %s35 = sphi 0, %s34
      %s51 = sphi 0, %s35
      %s55 = sphi 0, %s55
      %s57 = sphi 0, %s55
      %s58 = sphi 0, %s57
      %s72 = sphi 0, %s58
      %s78 = sphi 0, %s80
      %s81 = sphi 0, %s78
      %s82 = sphi 0, %s81
      %s98 = sphi 0, %s82
      %s104 = sphi 0, %s106
      %s107 = sphi 0, %s104
      %s108 = sphi 0, %s107
      %s124 = sphi 0, %s108
      %s130 = sphi 0, %s132
      %s133 = sphi 0, %s130
      %s134 = sphi 0, %s133
      %s150 = sphi 0, %s134
    $region4: #{tpu_custom_call.1} parent=1 // loop_header_branch
      %24 = sbr.rel (%p22) target = $region8
    $region5: #{tpu_custom_call.1} parent=1 // loop_body
      %s26 = ssub.s32 %s21, 1
      %s27 = ssub.s32 %s21, 2
      %s28 = sadd.s32 %s21, 1
      %s29 = ssub.s32 %s21, %s28
      %p30 = scmp.eq.s32.totalorder %s29, 0
      %s32 = sadd.s32 %s31, 1
      %s33 = scalar_select %p30, %s31, %s32
      %p36 = pneg %p30
      %p37 = scmp.eq.s32.totalorder %s21, 3
      %p38 = por %p36, %p37
      %p39 = scmp.ne.s32.totalorder %s31, %s34
      %p40 = scmp.eq.s32.totalorder %s21, 0
      %p41 = por %p39, %p40
      %p42 = scmp.ne.s32.totalorder %s31, %s34
      %p43 = scmp.eq.s32.totalorder %s26, 3
      %p44 = por %p42, %p43
      %p45 = scmp.ne.s32.totalorder %s34, %s35
      %p46 = scmp.eq.s32.totalorder %s26, 0
      %p47 = por %p45, %p46
      %p48 = scmp.ne.s32.totalorder %s34, %s35
      %p49 = scmp.eq.s32.totalorder %s27, 3
      %p50 = por %p48, %p49
      %p52 = scmp.ne.s32.totalorder %s35, %s51
      %p53 = scmp.eq.s32.totalorder %s27, 0
      %p54 = por %p52, %p53
      %s56 = sadd.s32 %s55, 1
      %p59 = scmp.eq.s32.totalorder %s21, 3
      %p60 = scmp.ne.s32.totalorder %s55, %s57
      %p61 = scmp.eq.s32.totalorder %s21, 0
      %p62 = por %p60, %p61
      %p63 = scmp.ne.s32.totalorder %s55, %s57
      %p64 = scmp.eq.s32.totalorder %s26, 3
      %p65 = por %p63, %p64
      %p66 = scmp.ne.s32.totalorder %s57, %s58
      %p67 = scmp.eq.s32.totalorder %s26, 0
      %p68 = por %p66, %p67
      %p69 = scmp.ne.s32.totalorder %s57, %s58
      %p70 = scmp.eq.s32.totalorder %s27, 3
      %p71 = por %p69, %p70
      %p73 = scmp.ne.s32.totalorder %s58, %s72
      %p74 = scmp.eq.s32.totalorder %s27, 0
      %p75 = por %p73, %p74
      %s76 = ssub.s32 %s21, %s28
      %p77 = scmp.eq.s32.totalorder %s76, 0
      %s79 = sadd.s32 %s78, 1
      %s80 = scalar_select %p77, %s78, %s79
      %p83 = pneg %p77
      %p84 = scmp.eq.s32.totalorder %s21, 3
      %p85 = por %p83, %p84
      %p86 = scmp.ne.s32.totalorder %s78, %s81
      %p87 = scmp.eq.s32.totalorder %s21, 0
      %p88 = por %p86, %p87
      %p89 = scmp.ne.s32.totalorder %s78, %s81
      %p90 = scmp.eq.s32.totalorder %s26, 3
      %p91 = por %p89, %p90
      %p92 = scmp.ne.s32.totalorder %s81, %s82
      %p93 = scmp.eq.s32.totalorder %s26, 0
      %p94 = por %p92, %p93
      %p95 = scmp.ne.s32.totalorder %s81, %s82
      %p96 = scmp.eq.s32.totalorder %s27, 3
      %p97 = por %p95, %p96
      %p99 = scmp.ne.s32.totalorder %s82, %s98
      %p100 = scmp.eq.s32.totalorder %s27, 0
      %p101 = por %p99, %p100
      %s102 = ssub.s32 %s21, %s28
      %p103 = scmp.eq.s32.totalorder %s102, 0
      %s105 = sadd.s32 %s104, 1
      %s106 = scalar_select %p103, %s104, %s105
      %p109 = pneg %p103
      %p110 = scmp.eq.s32.totalorder %s21, 3
      %p111 = por %p109, %p110
      %p112 = scmp.ne.s32.totalorder %s104, %s107
      %p113 = scmp.eq.s32.totalorder %s21, 0
      %p114 = por %p112, %p113
      %p115 = scmp.ne.s32.totalorder %s104, %s107
      %p116 = scmp.eq.s32.totalorder %s26, 3
      %p117 = por %p115, %p116
      %p118 = scmp.ne.s32.totalorder %s107, %s108
      %p119 = scmp.eq.s32.totalorder %s26, 0
      %p120 = por %p118, %p119
      %p121 = scmp.ne.s32.totalorder %s107, %s108
      %p122 = scmp.eq.s32.totalorder %s27, 3
      %p123 = por %p121, %p122
      %p125 = scmp.ne.s32.totalorder %s108, %s124
      %p126 = scmp.eq.s32.totalorder %s27, 0
      %p127 = por %p125, %p126
      %s128 = ssub.s32 %s21, %s28
      %p129 = scmp.eq.s32.totalorder %s128, 0
      %s131 = sadd.s32 %s130, 1
      %s132 = scalar_select %p129, %s130, %s131
      %p135 = pneg %p129
      %p136 = scmp.eq.s32.totalorder %s21, 3
      %p137 = por %p135, %p136
      %p138 = scmp.ne.s32.totalorder %s130, %s133
      %p139 = scmp.eq.s32.totalorder %s21, 0
      %p140 = por %p138, %p139
      %p141 = scmp.ne.s32.totalorder %s130, %s133
      %p142 = scmp.eq.s32.totalorder %s26, 3
      %p143 = por %p141, %p142
      %p144 = scmp.ne.s32.totalorder %s133, %s134
      %p145 = scmp.eq.s32.totalorder %s26, 0
      %p146 = por %p144, %p145
      %p147 = scmp.ne.s32.totalorder %s133, %s134
      %p148 = scmp.eq.s32.totalorder %s27, 3
      %p149 = por %p147, %p148
      %p151 = scmp.ne.s32.totalorder %s134, %s150
      %p152 = scmp.eq.s32.totalorder %s27, 0
      %p153 = por %p151, %p152
      %p154 = scmp.le.s32.totalorder 1, %s21
      %p155 = scmp.lt.s32.totalorder %s21, 5
      %p156 = pnand %p154, %p155
      %p157 = pneg %p156
      // Predicated region
      $region9: #{tpu_custom_call.1} parent=5 // pred_check
        _
      $region10: #{tpu_custom_call.1} parent=5 // pred_check_branch
        %159 = sbr.rel (%p156) target = $region12
      $region11: #{tpu_custom_call.1} parent=5 // pred_region
        %s160 = ssub.s32 %s21, 1
        // Predicated region
        $region13: #{tpu_custom_call.1} parent=11 // pred_check
          %p161 = pneg %p68
        $region14: #{tpu_custom_call.1} parent=11 // pred_check_branch
          %163 = sbr.rel (%p161) target = $region16
        $region15: #{tpu_custom_call.1} parent=11 // pred_region
          %s165 = ssub.s32 1024, 1024
          %166 = vsyncadd [#allocation6], %s165
          %s167 = sshll.u32 [#allocation5], 4
          %s168 = int_to_ptr.vmem [resolvable:$true] %s167
          %173 = dma.hbm_to_vmem [thread:$0]  %s1, 1024, %s168, [#allocation6], 64, 64, 4
        $region16: #{tpu_custom_call.1} parent=11 // pred_fallthru
          _
      $region12: #{tpu_custom_call.1} parent=5 // pred_fallthru
        _
      %p174 = scmp.lt.s32.totalorder %s21, 4
      // Predicated region
      $region17: #{tpu_custom_call.1} parent=5 // pred_check
        %p175 = pneg %p174
      $region18: #{tpu_custom_call.1} parent=5 // pred_check_branch
        %177 = sbr.rel (%p175) target = $region20
      $region19: #{tpu_custom_call.1} parent=5 // pred_region
        // Predicated region
        $region21: #{tpu_custom_call.1} parent=19 // pred_check
          %p178 = pneg %p41
        $region22: #{tpu_custom_call.1} parent=19 // pred_check_branch
          %180 = sbr.rel (%p178) target = $region24
        $region23: #{tpu_custom_call.1} parent=19 // pred_region
          %s181 = sand.u32 %s31, 1
          %s182 = scalar_lea.sflag [#allocation3], %s181
          %s183 = sand.u32 %s31, 1
          %s184 = smul.addr %s183, 64
          %s185 = scalar_lea.vmem [#allocation2], %s184
          %s186 = smul.u32 16, %s21
          %s188 = ssub.s32 1024, 1024
          %189 = vsyncadd %s182, %s188
          %s190 = smul.addr %s186, 64
          %s191 = scalar_lea.hbm %s0, %s190
          %s192 = sshll.u32 %s185, 4
          %s193 = int_to_ptr.vmem [resolvable:$true] %s192
          %198 = dma.hbm_to_vmem [thread:$0]  %s191, 1024, %s193, %s182, 64, 64, 4
        $region24: #{tpu_custom_call.1} parent=19 // pred_fallthru
          _
      $region20: #{tpu_custom_call.1} parent=5 // pred_fallthru
        _
      %p199 = scmp.le.s32.totalorder 1, %s21
      %p200 = scmp.lt.s32.totalorder %s21, 5
      %p201 = pnand %p199, %p200
      %p202 = pneg %p201
      // Predicated region
      $region25: #{tpu_custom_call.1} parent=5 // pred_check
        _
      $region26: #{tpu_custom_call.1} parent=5 // pred_check_branch
        %204 = sbr.rel (%p201) target = $region28
      $region27: #{tpu_custom_call.1} parent=5 // pred_region
        %s205 = ssub.s32 %s21, 1
        %s206 = sand.u32 %s34, 1
        %s207 = scalar_lea.sflag [#allocation3], %s206
        %s208 = sand.u32 %s34, 1
        %s209 = smul.addr %s208, 64
        %s210 = scalar_lea.vmem [#allocation2], %s209
        // Predicated region
        $region29: #{tpu_custom_call.1} parent=27 // pred_check
          %p211 = pneg %p47
        $region30: #{tpu_custom_call.1} parent=27 // pred_check_branch
          %213 = sbr.rel (%p211) target = $region32
        $region31: #{tpu_custom_call.1} parent=27 // pred_region
          %214 = dma.done %s207, 1024
        $region32: #{tpu_custom_call.1} parent=27 // pred_fallthru
          _
        // Predicated region
        $region33: #{tpu_custom_call.1} parent=27 // pred_check
          %p215 = pneg %p68
        $region34: #{tpu_custom_call.1} parent=27 // pred_check_branch
          %217 = sbr.rel (%p215) target = $region36
        $region35: #{tpu_custom_call.1} parent=27 // pred_region
          %218 = dma.done [#allocation6], 1024
        $region36: #{tpu_custom_call.1} parent=27 // pred_fallthru
          _
        %s219 = sand.u32 %s34, 1
        %s220 = scalar_lea.sflag [#allocation3], %s219
        %s221 = sand.u32 %s34, 1
        %s222 = smul.addr %s221, 64
        %s223 = scalar_lea.vmem [#allocation2], %s222
        %p224 = pneg %p47
        %p225 = pneg %p44
        %p226 = pneg %p68
        %p227 = pneg %p65
        %p228 = pneg %p94
        %p229 = pneg %p91
        %s230 = sand.u32 %s81, 1
        %s231 = scalar_lea.sflag [#allocation4], %s230
        %s232 = sand.u32 %s81, 1
        %s233 = smul.addr %s232, 64
        %s234 = scalar_lea.vmem [#allocation7], %s233
        %p235 = pneg %p120
        %p236 = pneg %p117
        %s237 = sand.u32 %s26, 1
        %s238 = scalar_lea.sflag [#allocation9], %s237
        %s239 = sand.u32 %s107, 1
        %s240 = scalar_lea.vmem [#allocation8], %s239
        %p241 = pneg %p146
        %p242 = pneg %p143
        %s243 = sand.u32 %s26, 1
        %s244 = scalar_lea.sflag [#allocation9], %s243
        %s245 = sand.u32 %s133, 1
        %s246 = scalar_lea.vmem [#allocation10], %s245
        %s247 = smul.u32 16, %s26
        %s248 = smul.u32 16, %s26
        %v250 = vld [vmem:[%s210] sm:$0xf]
        %v251 = vld [vmem:[%s210 + $0x4] sm:$0xf]
        %v252 = vld [vmem:[%s210 + $0x8] sm:$0xf]
        %v253 = vld [vmem:[%s210 + $0xc] sm:$0xf]
        %v254 = vld [vmem:[%s210 + $0x10] sm:$0xf]
        %v255 = vld [vmem:[%s210 + $0x14] sm:$0xf]
        %v256 = vld [vmem:[%s210 + $0x18] sm:$0xf]
        %v257 = vld [vmem:[%s210 + $0x1c] sm:$0xf]
        %v258 = vld [vmem:[%s210 + $0x20] sm:$0xf]
        %v259 = vld [vmem:[%s210 + $0x24] sm:$0xf]
        %v260 = vld [vmem:[%s210 + $0x28] sm:$0xf]
        %v261 = vld [vmem:[%s210 + $0x2c] sm:$0xf]
        %v262 = vld [vmem:[%s210 + $0x30] sm:$0xf]
        %v263 = vld [vmem:[%s210 + $0x34] sm:$0xf]
        %v264 = vld [vmem:[%s210 + $0x38] sm:$0xf]
        %v265 = vld [vmem:[%s210 + $0x3c] sm:$0xf]
        %v266 = vld [vmem:[#allocation5] sm:$0xf]
        %v267 = vld [vmem:[#allocation5 + $0x4] sm:$0xf]
        %v268 = vld [vmem:[#allocation5 + $0x8] sm:$0xf]
        %v269 = vld [vmem:[#allocation5 + $0xc] sm:$0xf]
        %v270 = vld [vmem:[#allocation5 + $0x10] sm:$0xf]
        %v271 = vld [vmem:[#allocation5 + $0x14] sm:$0xf]
        %v272 = vld [vmem:[#allocation5 + $0x18] sm:$0xf]
        %v273 = vld [vmem:[#allocation5 + $0x1c] sm:$0xf]
        %v274 = vld [vmem:[#allocation5 + $0x20] sm:$0xf]
        %v275 = vld [vmem:[#allocation5 + $0x24] sm:$0xf]
        %v276 = vld [vmem:[#allocation5 + $0x28] sm:$0xf]
        %v277 = vld [vmem:[#allocation5 + $0x2c] sm:$0xf]
        %v278 = vld [vmem:[#allocation5 + $0x30] sm:$0xf]
        %v279 = vld [vmem:[#allocation5 + $0x34] sm:$0xf]
        %v280 = vld [vmem:[#allocation5 + $0x38] sm:$0xf]
        %v281 = vld [vmem:[#allocation5 + $0x3c] sm:$0xf]
        %v298 = vunpack.c.l.b16 %v250
        %v299 = vunpack.c.l.b16 %v251
        %v300 = vunpack.c.l.b16 %v252
        %v301 = vunpack.c.l.b16 %v253
        %v302 = vunpack.c.l.b16 %v254
        %v303 = vunpack.c.l.b16 %v255
        %v304 = vunpack.c.l.b16 %v256
        %v305 = vunpack.c.l.b16 %v257
        %v306 = vunpack.c.l.b16 %v258
        %v307 = vunpack.c.l.b16 %v259
        %v308 = vunpack.c.l.b16 %v260
        %v309 = vunpack.c.l.b16 %v261
        %v310 = vunpack.c.l.b16 %v262
        %v311 = vunpack.c.l.b16 %v263
        %v312 = vunpack.c.l.b16 %v264
        %v313 = vunpack.c.l.b16 %v265
        %v314 = vpack.c.b16 %v299, %v298
        %v315 = vpack.c.b16 %v301, %v300
        %v316 = vpack.c.b16 %v303, %v302
        %v317 = vpack.c.b16 %v305, %v304
        %v318 = vpack.c.b16 %v307, %v306
        %v319 = vpack.c.b16 %v309, %v308
        %v320 = vpack.c.b16 %v311, %v310
        %v321 = vpack.c.b16 %v313, %v312
        %v346 = vunpack.c.l.b16 %v266
        %v347 = vunpack.c.l.b16 %v267
        %v348 = vunpack.c.l.b16 %v268
        %v349 = vunpack.c.l.b16 %v269
        %v350 = vunpack.c.l.b16 %v270
        %v351 = vunpack.c.l.b16 %v271
        %v352 = vunpack.c.l.b16 %v272
        %v353 = vunpack.c.l.b16 %v273
        %v354 = vunpack.c.l.b16 %v274
        %v355 = vunpack.c.l.b16 %v275
        %v356 = vunpack.c.l.b16 %v276
        %v357 = vunpack.c.l.b16 %v277
        %v358 = vunpack.c.l.b16 %v278
        %v359 = vunpack.c.l.b16 %v279
        %v360 = vunpack.c.l.b16 %v280
        %v361 = vunpack.c.l.b16 %v281
        %v362 = vpack.c.b16 %v347, %v346
        %v363 = vpack.c.b16 %v349, %v348
        %v364 = vpack.c.b16 %v351, %v350
        %v365 = vpack.c.b16 %v353, %v352
        %v366 = vpack.c.b16 %v355, %v354
        %v367 = vpack.c.b16 %v357, %v356
        %v368 = vpack.c.b16 %v359, %v358
        %v369 = vpack.c.b16 %v361, %v360
        %378 = vmatprep.subr.bf16.mxu0 0
        %379 = vmatpush1.bf16.msra.mxu0 %v369
        %380 = vmatprep.subr.bf16.mxu0 0
        %381 = vmatpush1.bf16.msra.mxu0 %v368
        %382 = vmatprep.subr.bf16.mxu0 0
        %383 = vmatpush1.bf16.msra.mxu0 %v367
        %384 = vmatprep.subr.bf16.mxu0 0
        %385 = vmatpush1.bf16.msra.mxu0 %v366
        %386 = vmatprep.subr.bf16.mxu0 0
        %387 = vmatpush1.bf16.msra.mxu0 %v365
        %388 = vmatprep.subr.bf16.mxu0 0
        %389 = vmatpush1.bf16.msra.mxu0 %v364
        %390 = vmatprep.subr.bf16.mxu0 0
        %391 = vmatpush1.bf16.msra.mxu0 %v363
        %392 = vmatprep.subr.bf16.mxu0 0
        %393 = vmatpush1.bf16.msra.mxu0 %v362
        %394 = vmatprep.subr.bf16.mxu0 0
        %395 = vmatpush2.bf16.msra.mxu0 0
        %396 = vmatprep.subr.bf16.mxu0 0
        %397 = vmatpush2.bf16.msra.mxu0 0
        %398 = vmatprep.subr.bf16.mxu0 0
        %399 = vmatpush2.bf16.msra.mxu0 0
        %400 = vmatprep.subr.bf16.mxu0 0
        %401 = vmatpush2.bf16.msra.mxu0 0
        %402 = vmatprep.subr.bf16.mxu0 0
        %403 = vmatpush2.bf16.msra.mxu0 0
        %404 = vmatprep.subr.bf16.mxu0 0
        %405 = vmatpush2.bf16.msra.mxu0 0
        %406 = vmatprep.subr.bf16.mxu0 0
        %407 = vmatpush2.bf16.msra.mxu0 0
        %408 = vmatprep.subr.bf16.mxu0 0
        %409 = vmatpush2.bf16.msra.mxu0 0
        %410 = vmatprep.mubr.bf16.mxu0 0
        %411 = vmatmul.mubr.bf16.gmra.mxu0 %v314
        %v412 = vpop.f32.mrf.mxu0
        %v413 = vadd.f32 0.0, %v412
        %v414 = vpop.f32.mrf.mxu0
        %v415 = vpop.f32.mrf.mxu0
        %v416 = vadd.f32 0.0, %v415
        %v417 = vpop.f32.mrf.mxu0
        %418 = vmatprep.mubr.bf16.mxu0 0
        %419 = vmatmul.mubr.bf16.gmra.mxu0 %v315
        %v420 = vpop.f32.mrf.mxu0
        %v421 = vadd.f32 0.0, %v420
        %v422 = vpop.f32.mrf.mxu0
        %v423 = vpop.f32.mrf.mxu0
        %v424 = vadd.f32 0.0, %v423
        %v425 = vpop.f32.mrf.mxu0
        %426 = vmatprep.mubr.bf16.mxu0 0
        %427 = vmatmul.mubr.bf16.gmra.mxu0 %v316
        %v428 = vpop.f32.mrf.mxu0
        %v429 = vadd.f32 0.0, %v428
        %v430 = vpop.f32.mrf.mxu0
        %v431 = vpop.f32.mrf.mxu0
        %v432 = vadd.f32 0.0, %v431
        %v433 = vpop.f32.mrf.mxu0
        %434 = vmatprep.mubr.bf16.mxu0 0
        %435 = vmatmul.mubr.bf16.gmra.mxu0 %v317
        %v436 = vpop.f32.mrf.mxu0
        %v437 = vadd.f32 0.0, %v436
        %v438 = vpop.f32.mrf.mxu0
        %v439 = vpop.f32.mrf.mxu0
        %v440 = vadd.f32 0.0, %v439
        %v441 = vpop.f32.mrf.mxu0
        %442 = vmatprep.mubr.bf16.mxu0 0
        %443 = vmatmul.mubr.bf16.gmra.mxu0 %v318
        %v444 = vpop.f32.mrf.mxu0
        %v445 = vadd.f32 0.0, %v444
        %v446 = vpop.f32.mrf.mxu0
        %v447 = vpop.f32.mrf.mxu0
        %v448 = vadd.f32 0.0, %v447
        %v449 = vpop.f32.mrf.mxu0
        %450 = vmatprep.mubr.bf16.mxu0 0
        %451 = vmatmul.mubr.bf16.gmra.mxu0 %v319
        %v452 = vpop.f32.mrf.mxu0
        %v453 = vadd.f32 0.0, %v452
        %v454 = vpop.f32.mrf.mxu0
        %v455 = vpop.f32.mrf.mxu0
        %v456 = vadd.f32 0.0, %v455
        %v457 = vpop.f32.mrf.mxu0
        %458 = vmatprep.mubr.bf16.mxu0 0
        %459 = vmatmul.mubr.bf16.gmra.mxu0 %v320
        %v460 = vpop.f32.mrf.mxu0
        %v461 = vadd.f32 0.0, %v460
        %v462 = vpop.f32.mrf.mxu0
        %v463 = vpop.f32.mrf.mxu0
        %v464 = vadd.f32 0.0, %v463
        %v465 = vpop.f32.mrf.mxu0
        %466 = vmatprep.mubr.bf16.mxu0 0
        %467 = vmatmul.mubr.bf16.gmra.mxu0 %v321
        %v468 = vpop.f32.mrf.mxu0
        %v469 = vadd.f32 0.0, %v468
        %v470 = vpop.f32.mrf.mxu0
        %v471 = vpop.f32.mrf.mxu0
        %v472 = vadd.f32 0.0, %v471
        %v473 = vpop.f32.mrf.mxu0
        %474 = vdwg.mxu0
        %v475 = vpack.c.bf16 %v416, %v413
        %v476 = vpack.c.bf16 %v424, %v421
        %v477 = vpack.c.bf16 %v432, %v429
        %v478 = vpack.c.bf16 %v440, %v437
        %v479 = vpack.c.bf16 %v448, %v445
        %v480 = vpack.c.bf16 %v456, %v453
        %v481 = vpack.c.bf16 %v464, %v461
        %v482 = vpack.c.bf16 %v472, %v469
        %v491 = vunpack.c.l.b16 %v475
        %v492 = vunpack.c.h.b16 %v475
        %v493 = vunpack.c.l.b16 %v476
        %v494 = vunpack.c.h.b16 %v476
        %v495 = vunpack.c.l.b16 %v477
        %v496 = vunpack.c.h.b16 %v477
        %v497 = vunpack.c.l.b16 %v478
        %v498 = vunpack.c.h.b16 %v478
        %v499 = vunpack.c.l.b16 %v479
        %v500 = vunpack.c.h.b16 %v479
        %v501 = vunpack.c.l.b16 %v480
        %v502 = vunpack.c.h.b16 %v480
        %v503 = vunpack.c.l.b16 %v481
        %v504 = vunpack.c.h.b16 %v481
        %v505 = vunpack.c.l.b16 %v482
        %v506 = vunpack.c.h.b16 %v482
        %v507 = vpack.c.b16 %v491, %v491
        %v508 = vpack.c.b16 %v492, %v492
        %v509 = vpack.c.b16 %v493, %v493
        %v510 = vpack.c.b16 %v494, %v494
        %v511 = vpack.c.b16 %v495, %v495
        %v512 = vpack.c.b16 %v496, %v496
        %v513 = vpack.c.b16 %v497, %v497
        %v514 = vpack.c.b16 %v498, %v498
        %v515 = vpack.c.b16 %v499, %v499
        %v516 = vpack.c.b16 %v500, %v500
        %v517 = vpack.c.b16 %v501, %v501
        %v518 = vpack.c.b16 %v502, %v502
        %v519 = vpack.c.b16 %v503, %v503
        %v520 = vpack.c.b16 %v504, %v504
        %v521 = vpack.c.b16 %v505, %v505
        %v522 = vpack.c.b16 %v506, %v506
        %539 = vst [vmem:[%s234] sm:$0xf] %v507
        %540 = vst [vmem:[%s234 + $0x4] sm:$0xf] %v508
        %541 = vst [vmem:[%s234 + $0x8] sm:$0xf] %v509
        %542 = vst [vmem:[%s234 + $0xc] sm:$0xf] %v510
        %543 = vst [vmem:[%s234 + $0x10] sm:$0xf] %v511
        %544 = vst [vmem:[%s234 + $0x14] sm:$0xf] %v512
        %545 = vst [vmem:[%s234 + $0x18] sm:$0xf] %v513
        %546 = vst [vmem:[%s234 + $0x1c] sm:$0xf] %v514
        %547 = vst [vmem:[%s234 + $0x20] sm:$0xf] %v515
        %548 = vst [vmem:[%s234 + $0x24] sm:$0xf] %v516
        %549 = vst [vmem:[%s234 + $0x28] sm:$0xf] %v517
        %550 = vst [vmem:[%s234 + $0x2c] sm:$0xf] %v518
        %551 = vst [vmem:[%s234 + $0x30] sm:$0xf] %v519
        %552 = vst [vmem:[%s234 + $0x34] sm:$0xf] %v520
        %553 = vst [vmem:[%s234 + $0x38] sm:$0xf] %v521
        %554 = vst [vmem:[%s234 + $0x3c] sm:$0xf] %v522
        %v555 = vadd.f32 %v413, %v416
        %v556 = vadd.f32 %v555, %v421
        %v557 = vadd.f32 %v556, %v424
        %v558 = vadd.f32 %v557, %v429
        %v559 = vadd.f32 %v558, %v432
        %v560 = vadd.f32 %v559, %v437
        %v561 = vadd.f32 %v560, %v440
        %v562 = vadd.f32 %v561, %v445
        %v563 = vadd.f32 %v562, %v448
        %v564 = vadd.f32 %v563, %v453
        %v565 = vadd.f32 %v564, %v456
        %v566 = vadd.f32 %v565, %v461
        %v567 = vadd.f32 %v566, %v464
        %v568 = vadd.f32 %v567, %v469
        %v569 = vadd.f32 %v568, %v472
        %v570 = vrot.slane %v569, 4
        %v571 = vadd.f32 %v569, %v570
        %v572 = vrot.slane %v571, 2
        %v573 = vadd.f32 %v571, %v572
        %v574 = vrot.slane %v573, 1
        %v575 = vadd.f32 %v573, %v574
        %576 = vst [vmem:[%s240] sm:$0x1] %v575
        %v577 = vmul.f32 %v413, %v413
        %v578 = vmul.f32 %v416, %v416
        %v579 = vmul.f32 %v421, %v421
        %v580 = vmul.f32 %v424, %v424
        %v581 = vmul.f32 %v429, %v429
        %v582 = vmul.f32 %v432, %v432
        %v583 = vmul.f32 %v437, %v437
        %v584 = vmul.f32 %v440, %v440
        %v585 = vmul.f32 %v445, %v445
        %v586 = vmul.f32 %v448, %v448
        %v587 = vmul.f32 %v453, %v453
        %v588 = vmul.f32 %v456, %v456
        %v589 = vmul.f32 %v461, %v461
        %v590 = vmul.f32 %v464, %v464
        %v591 = vmul.f32 %v469, %v469
        %v592 = vmul.f32 %v472, %v472
        %v593 = vadd.f32 %v577, %v578
        %v594 = vadd.f32 %v593, %v579
        %v595 = vadd.f32 %v594, %v580
        %v596 = vadd.f32 %v595, %v581
        %v597 = vadd.f32 %v596, %v582
        %v598 = vadd.f32 %v597, %v583
        %v599 = vadd.f32 %v598, %v584
        %v600 = vadd.f32 %v599, %v585
        %v601 = vadd.f32 %v600, %v586
        %v602 = vadd.f32 %v601, %v587
        %v603 = vadd.f32 %v602, %v588
        %v604 = vadd.f32 %v603, %v589
        %v605 = vadd.f32 %v604, %v590
        %v606 = vadd.f32 %v605, %v591
        %v607 = vadd.f32 %v606, %v592
        %v608 = vrot.slane %v607, 4
        %v609 = vadd.f32 %v607, %v608
        %v610 = vrot.slane %v609, 2
        %v611 = vadd.f32 %v609, %v610
        %v612 = vrot.slane %v611, 1
        %v613 = vadd.f32 %v611, %v612
        %614 = vst [vmem:[%s246] sm:$0x1] %v613
        %s615 = sand.u32 %s81, 1
        %s616 = scalar_lea.sflag [#allocation4], %s615
        %s617 = sand.u32 %s81, 1
        %s618 = smul.addr %s617, 64
        %s619 = scalar_lea.vmem [#allocation7], %s618
        %s620 = sand.u32 %s26, 1
        %s621 = scalar_lea.sflag [#allocation9], %s620
        %s622 = sand.u32 %s107, 1
        %s623 = scalar_lea.vmem [#allocation8], %s622
        %s624 = sand.u32 %s26, 1
        %s625 = scalar_lea.sflag [#allocation9], %s624
        %s626 = sand.u32 %s133, 1
        %s627 = scalar_lea.vmem [#allocation10], %s626
        // Predicated region
        $region37: #{tpu_custom_call.1} parent=27 // pred_check
          %p628 = pneg %p91
        $region38: #{tpu_custom_call.1} parent=27 // pred_check_branch
          %630 = sbr.rel (%p628) target = $region40
        $region39: #{tpu_custom_call.1} parent=27 // pred_region
          %s631 = smul.u32 16, %s26
          %s633 = ssub.s32 1024, 1024
          %634 = vsyncadd %s616, %s633
          %s635 = smul.addr %s631, 64
          %s636 = scalar_lea.hbm %s2, %s635
          %s637 = sshll.u32 %s619, 4
          %s638 = int_to_ptr.vmem [resolvable:$true] %s637
          %643 = dma.vmem_to_hbm [thread:$0]  %s638, 1024, %s636, %s616, 64, 64, 4
        $region40: #{tpu_custom_call.1} parent=27 // pred_fallthru
          _
        // Predicated region
        $region41: #{tpu_custom_call.1} parent=27 // pred_check
          %p644 = pneg %p117
        $region42: #{tpu_custom_call.1} parent=27 // pred_check_branch
          %646 = sbr.rel (%p644) target = $region44
        $region43: #{tpu_custom_call.1} parent=27 // pred_region
          %s648 = ssub.s32 16, 16
          %649 = vsyncadd %s621, %s648
          %s650 = smul.addr %s26, 16
          %s651 = scalar_lea.hbm %s3, %s650
          %s653 = sshll.u32 %s623, 4
          %s654 = int_to_ptr.vmem [resolvable:$true] %s653
          %656 = dma.vmem_to_hbm [thread:$0]  %s654, 16, %s651, %s621
        $region44: #{tpu_custom_call.1} parent=27 // pred_fallthru
          _
        // Predicated region
        $region45: #{tpu_custom_call.1} parent=27 // pred_check
          %p657 = pneg %p143
        $region46: #{tpu_custom_call.1} parent=27 // pred_check_branch
          %659 = sbr.rel (%p657) target = $region48
        $region47: #{tpu_custom_call.1} parent=27 // pred_region
          %s661 = ssub.s32 16, 16
          %662 = vsyncadd %s625, %s661
          %s663 = smul.addr %s26, 16
          %s664 = scalar_lea.hbm %s4, %s663
          %s666 = sshll.u32 %s627, 4
          %s667 = int_to_ptr.vmem [resolvable:$true] %s666
          %669 = dma.vmem_to_hbm [thread:$0]  %s667, 16, %s664, %s625
        $region48: #{tpu_custom_call.1} parent=27 // pred_fallthru
          _
      $region28: #{tpu_custom_call.1} parent=5 // pred_fallthru
        _
      %p670 = scmp.le.s32.totalorder 2, %s21
      // Predicated region
      $region49: #{tpu_custom_call.1} parent=5 // pred_check
        %p671 = pneg %p670
      $region50: #{tpu_custom_call.1} parent=5 // pred_check_branch
        %673 = sbr.rel (%p671) target = $region52
      $region51: #{tpu_custom_call.1} parent=5 // pred_region
        %s674 = ssub.s32 %s21, 2
        // Predicated region
        $region53: #{tpu_custom_call.1} parent=51 // pred_check
          %p675 = pneg %p97
        $region54: #{tpu_custom_call.1} parent=51 // pred_check_branch
          %677 = sbr.rel (%p675) target = $region56
        $region55: #{tpu_custom_call.1} parent=51 // pred_region
          %s678 = sand.u32 %s82, 1
          %s679 = scalar_lea.sflag [#allocation4], %s678
          %s680 = sand.u32 %s82, 1
          %s681 = smul.addr %s680, 64
          %s682 = scalar_lea.vmem [#allocation7], %s681
          %683 = dma.done %s679, 1024
        $region56: #{tpu_custom_call.1} parent=51 // pred_fallthru
          _
        // Predicated region
        $region57: #{tpu_custom_call.1} parent=51 // pred_check
          %p684 = pneg %p123
        $region58: #{tpu_custom_call.1} parent=51 // pred_check_branch
          %686 = sbr.rel (%p684) target = $region60
        $region59: #{tpu_custom_call.1} parent=51 // pred_region
          %s687 = sand.u32 %s27, 1
          %s688 = scalar_lea.sflag [#allocation9], %s687
          %s689 = sand.u32 %s108, 1
          %s690 = scalar_lea.vmem [#allocation8], %s689
          %691 = dma.done %s688, 16
        $region60: #{tpu_custom_call.1} parent=51 // pred_fallthru
          _
        // Predicated region
        $region61: #{tpu_custom_call.1} parent=51 // pred_check
          %p692 = pneg %p149
        $region62: #{tpu_custom_call.1} parent=51 // pred_check_branch
          %694 = sbr.rel (%p692) target = $region64
        $region63: #{tpu_custom_call.1} parent=51 // pred_region
          %s695 = sand.u32 %s27, 1
          %s696 = scalar_lea.sflag [#allocation9], %s695
          %s697 = sand.u32 %s134, 1
          %s698 = scalar_lea.vmem [#allocation10], %s697
          %699 = dma.done %s696, 16
        $region64: #{tpu_custom_call.1} parent=51 // pred_fallthru
          _
      $region52: #{tpu_custom_call.1} parent=5 // pred_fallthru
        _
    $region6: #{tpu_custom_call.1} parent=1 // loop_footer
      %s25 = sadd.s32 1, %s21
    $region7: #{tpu_custom_call.1} parent=1 // loop_footer_branch
      %20 = sbr.rel target = $region3
    $region8: #{tpu_custom_call.1} parent=1 // loop_exit
      _
    %700 = vsyncpa [#allocation3], 1
    %s701 = scalar_lea.sflag [#allocation3], 1
    %702 = vsyncpa %s701, 1
    %703 = vsyncpa [#allocation6], 1
    %704 = vsyncpa [#allocation4], 1
    %s705 = scalar_lea.sflag [#allocation4], 1
    %706 = vsyncpa %s705, 1
    %707 = vsyncpa [#allocation9], 1
    %s708 = scalar_lea.sflag [#allocation9], 1
    %709 = vsyncpa %s708, 1

</llo_original>
